<compile_context>
chip_gen: v5e
topology: v5e:2x2
jax: 0.10.0
libtpu: 0.0.40
codegen_flags: <defaults>
</compile_context>

<pallas_src>
import math
import functools

import jax
import jax.numpy as jnp
from jax import lax
from jax.experimental import pallas as pl
from jax.experimental.pallas import tpu as pltpu


def _sigmoid(x):
    return 1.0 / (1.0 + jnp.exp(-x))


def _round_up(n, m):
    return ((n + m - 1) // m) * m


# -----------------------------------------------------------------------------
# Kernel 1: fused input projection  wc = x @ [WzT | WhT] + [bz | bh]
# -----------------------------------------------------------------------------
def _input_proj_kernel(x_ref, wcT_ref, bc_ref, o_ref):
    o_ref[...] = (
        jnp.dot(x_ref[...], wcT_ref[...], preferred_element_type=jnp.float32)
        + bc_ref[...])


def _pick_row_tile(rows, d, h2):
    # Largest row tile (cap 512 for cross-generation VMEM safety; v6e could go
    # to 1024) whose double-buffered footprint stays inside a ~24 MiB budget.
    budget = 24 * 1024 * 1024
    for cand in (512, 256, 128, 64, 32, 16, 8):
        tile = min(cand, rows)
        footprint = (2 * tile * (d + h2) + 2 * (d * h2 + h2)) * 4
        if footprint <= budget:
            return tile
    return 8


def _input_projections(x2, wcT, bc):
    rows, d = x2.shape
    h2 = wcT.shape[1]
    tile = _pick_row_tile(rows, d, h2)
    grid = (pl.cdiv(rows, tile),)   # ragged last block handled by Pallas
    return pl.pallas_call(
        _input_proj_kernel,
        out_shape=jax.ShapeDtypeStruct((rows, h2), jnp.float32),
        grid_spec=pltpu.PrefetchScalarGridSpec(
            num_scalar_prefetch=0,
            grid=grid,
            in_specs=[
                pl.BlockSpec((tile, d), lambda i: (i, 0)),
                pl.BlockSpec((d, h2), lambda i: (0, 0)),
                pl.BlockSpec((1, h2), lambda i: (0, 0)),
            ],
            out_specs=pl.BlockSpec((tile, h2), lambda i: (i, 0)),
        ),
        compiler_params=pltpu.CompilerParams(
            dimension_semantics=("parallel",),
            vmem_limit_bytes=48 * 1024 * 1024),
    )(x2, wcT, bc)


# -----------------------------------------------------------------------------
# Kernel 2: time-chunked liGRU recurrence (hidden state resident in VMEM)
# -----------------------------------------------------------------------------
def _recurrence_kernel(wc_ref, ucT_ref, o_ref, h_ref, *, drop_scale, tc, hp):
    # New batch tile -> reset the hidden state.
    @pl.when(pl.program_id(1) == 0)
    def _():
        h_ref[...] = jnp.zeros_like(h_ref)

    ucT = ucT_ref[...]                      # (Hp, 2*Hp), resident across steps

    def step(t, h):
        # One fused recurrent matmul per timestep: [z_pre | h_pre].
        pre = wc_ref[t] + jnp.dot(h, ucT, preferred_element_type=jnp.float32)
        zt = _sigmoid(pre[:, :hp])
        hcand = jnp.maximum(pre[:, hp:], 0.0) * drop_scale   # relu act * drop
        h_new = h + (1.0 - zt) * (hcand - h)                 # == z*h + (1-z)*hc
        o_ref[t] = h_new
        return h_new

    h_ref[...] = lax.fori_loop(0, tc, step, h_ref[...], unroll=True)


def _recurrence(wc_all, ucT, drop, *, hp, tc, btile):
    tp, bp, h2 = wc_all.shape
    nb = bp // btile
    # NOTE: drop_scale is baked in as a compile-time constant (eval-mode
    # scalar); pass it via SMEM scalar-prefetch instead if it varies at runtime.
    kernel = functools.partial(_recurrence_kernel,
                               drop_scale=float(1.0 - drop), tc=tc, hp=hp)
    # TODO(synk): for very large H on v7x (64 MiB VMEM), store UcT as bf16 or
    # request pipeline_mode=pl.Buffered(1) on its BlockSpec.
    return pl.pallas_call(
        kernel,
        out_shape=jax.ShapeDtypeStruct((tp, bp, hp), jnp.float32),
        grid_spec=pltpu.PrefetchScalarGridSpec(
            num_scalar_prefetch=0,
            grid=(nb, tp // tc),
            in_specs=[
                pl.BlockSpec((tc, btile, h2), lambda b, s: (s, b, 0)),
                pl.BlockSpec((hp, h2), lambda b, s: (0, 0)),
            ],
            out_specs=pl.BlockSpec((tc, btile, hp), lambda b, s: (s, b, 0)),
            scratch_shapes=[pltpu.VMEM((btile, hp), jnp.float32)],
        ),
        compiler_params=pltpu.CompilerParams(
            # batch tiles are independent (megacore-shardable on v7x);
            # time axis is a true recurrence.
            dimension_semantics=("parallel", "arbitrary"),
            vmem_limit_bytes=48 * 1024 * 1024),
    )(wc_all, ucT)


# -----------------------------------------------------------------------------
# Wrapper: single liGRU layer, unidirectional, eval mode.  x: (T,B,D) -> (T,B,H)
# -----------------------------------------------------------------------------
def ligru_forward(x, wzT, whT, bz, bh, uzT, uhT, drop, *, time_chunk=16):
    # TODO(synk): bidirectional path (flip+concat), BatchNorm/LayerNorm branches
    # and train-mode Bernoulli dropout masks are not implemented (eval path only).
    T, B, D = x.shape
    H = wzT.shape[1]

    # Lane/sublane-dense padded shapes.  Padded hidden columns provably stay 0
    # through the recurrence (zero weights/bias -> z=0.5, hcand=0, h stays 0).
    Hp = _round_up(H, 128)
    Bp = _round_up(B, 8)
    if Bp >= 16:
        Bp = _round_up(Bp, 16)     # 2 batch tiles (helps v7x's 2 TensorCores)
        btile = Bp // 2
    else:
        btile = Bp
    Tc = min(T, time_chunk)
    Tp = _round_up(T, Tc)

    f32 = jnp.float32
    # Fused + padded weights: WcT = [WzT | WhT], bc = [bz | bh], UcT = [UzT | UhT].
    wcT = jnp.zeros((D, 2 * Hp), f32)
    wcT = wcT.at[:, :H].set(wzT).at[:, Hp:Hp + H].set(whT)
    bc = jnp.zeros((1, 2 * Hp), f32)
    bc = bc.at[:, :H].set(bz.reshape(1, H)).at[:, Hp:Hp + H].set(bh.reshape(1, H))
    ucT = jnp.zeros((Hp, 2 * Hp), f32)
    ucT = ucT.at[:H, :H].set(uzT).at[:H, Hp:Hp + H].set(uhT)

    xp = jnp.zeros((Tp, Bp, D), f32).at[:T, :B].set(x.astype(f32))

    # Kernel 1: one fused projection over all T*B rows (lane-dense 2*Hp slab).
    wc_flat = _input_projections(xp.reshape(Tp * Bp, D), wcT, bc)
    wc_all = wc_flat.reshape(Tp, Bp, 2 * Hp)

    # Kernel 2: sequential recurrence, time-chunked.
    out_p = _recurrence(wc_all, ucT, drop, hp=Hp, tc=Tc, btile=btile)
    return out_p[:T, :B, :H]


# -----------------------------------------------------------------------------
# Plain-JAX reference (mirrors the PyTorch liGRU forward, eval mode), f32/highest.
# -----------------------------------------------------------------------------
def ligru_reference(x, wzT, whT, bz, bh, uzT, uhT, drop):
    hi = lax.Precision.HIGHEST
    T, B, D = x.shape
    H = uzT.shape[0]
    wz_all = jnp.einsum('tbd,dh->tbh', x, wzT, precision=hi) + bz
    wh_all = jnp.einsum('tbd,dh->tbh', x, whT, precision=hi) + bh
    h = jnp.zeros((B, H), jnp.float32)
    outs = []
    for t in range(T):
        zt = _sigmoid(wz_all[t] + jnp.dot(h, uzT, precision=hi))
        at = wh_all[t] + jnp.dot(h, uhT, precision=hi)
        hcand = jnp.maximum(at, 0.0) * (1.0 - drop)
        h = zt * h + (1.0 - zt) * hcand
        outs.append(h)
    return jnp.stack(outs)


if __name__ == "__main__":
    key = jax.random.PRNGKey(0)
    T, B, D, H = 8, 2, 16, 32          # seq=8, batch=2, inp_dim=16, ligru_lay=32
    drop = 0.2                         # ligru_drop, eval mode -> scalar scaling

    ks = jax.random.split(key, 7)
    x = jax.random.normal(ks[0], (T, B, D), dtype=jnp.float32)
    s_in, s_h = 1.0 / math.sqrt(D), 1.0 / math.sqrt(H)
    wzT = jax.random.normal(ks[1], (D, H), dtype=jnp.float32) * s_in
    whT = jax.random.normal(ks[2], (D, H), dtype=jnp.float32) * s_in
    bz = jax.random.normal(ks[3], (1, H), dtype=jnp.float32) * s_in
    bh = jax.random.normal(ks[4], (1, H), dtype=jnp.float32) * s_in
    uzT = jax.random.normal(ks[5], (H, H), dtype=jnp.float32) * s_h
    uhT = jax.random.normal(ks[6], (H, H), dtype=jnp.float32) * s_h

    out = ligru_forward(x, wzT, whT, bz, bh, uzT, uhT, drop)
    out = jax.block_until_ready(out)

    ref = ligru_reference(x, wzT, whT, bz, bh, uzT, uhT, drop)
    assert out.shape == (T, B, H), out.shape
    # Kernel matmuls run at native (bf16-pass) MXU precision -> relaxed tolerance
    # vs the 'highest'-precision reference.
    assert jnp.allclose(out, ref, atol=5e-2, rtol=5e-2), (
        float(jnp.max(jnp.abs(out - ref))))

    print("KERNEL_OK")
</pallas_src>

<mosaic_0001>
module attributes {stable_mosaic.version = 11 : i64} {
  func.func @_input_proj_kernel(%arg0: i32, %arg1: memref<64x16xf32, #tpu.memory_space<vmem>>, %arg2: memref<16x256xf32, #tpu.memory_space<vmem>>, %arg3: memref<1x256xf32, #tpu.memory_space<vmem>>, %arg4: memref<64x256xf32, #tpu.memory_space<vmem>>) attributes {dimension_semantics = [#tpu.dimension_semantics<parallel>], iteration_bounds = array<i64: 1>, scalar_prefetch = 0 : i64, scratch_operands = 0 : i64, tpu.core_type = #tpu.core_type<tc>, window_params = [{transform_indices = @transform_0, window_bounds = array<i64: 64, 16>}, {pipeline_mode = #tpu.pipeline_mode<synchronous>, transform_indices = @transform_1, window_bounds = array<i64: 16, 256>}, {pipeline_mode = #tpu.pipeline_mode<synchronous>, transform_indices = @transform_2, window_bounds = array<i64: 1, 256>}, {transform_indices = @transform_3, window_bounds = array<i64: 64, 256>}]} {
    %c0 = arith.constant 0 : index
    %c0_0 = arith.constant 0 : index
    %0 = vector.load %arg1[%c0, %c0_0] : memref<64x16xf32, #tpu.memory_space<vmem>>, vector<64x16xf32>
    %c0_1 = arith.constant 0 : index
    %c0_2 = arith.constant 0 : index
    %1 = vector.load %arg2[%c0_1, %c0_2] : memref<16x256xf32, #tpu.memory_space<vmem>>, vector<16x256xf32>
    %cst = arith.constant dense<0.000000e+00> : vector<64x256xf32>
    %2 = tpu.matmul %0, %1, %cst {dimension_numbers = #tpu.dot_dimension_numbers<[1], [0], [0], [1], [0, 0, 1, 1], [], []>} : vector<64x16xf32>, vector<16x256xf32>, vector<64x256xf32> -> vector<64x256xf32>
    %c0_3 = arith.constant 0 : index
    %c0_4 = arith.constant 0 : index
    %3 = vector.load %arg3[%c0_3, %c0_4] : memref<1x256xf32, #tpu.memory_space<vmem>>, vector<1x256xf32>
    %4 = vector.broadcast %3 : vector<1x256xf32> to vector<64x256xf32>
    %5 = arith.addf %2, %4 : vector<64x256xf32>
    %c0_5 = arith.constant 0 : index
    %c0_6 = arith.constant 0 : index
    %6 = vector.load %arg4[%c0_5, %c0_6] : memref<64x256xf32, #tpu.memory_space<vmem>>, vector<64x256xf32>
    tpu.vector_store %arg4[%c0_5, %c0_6], %5 {strides = array<i32>} : memref<64x256xf32, #tpu.memory_space<vmem>>, vector<64x256xf32>,
    return
  }
  func.func @transform_0(%arg0: i32) -> (i32, i32) {
    %c0_i32 = arith.constant 0 : i32
    %c0_i32_0 = arith.constant 0 : i32
    return %arg0, %c0_i32 : i32, i32
  }
  func.func @transform_1(%arg0: i32) -> (i32, i32) {
    %c0_i32 = arith.constant 0 : i32
    %c0_i32_0 = arith.constant 0 : i32
    %c0_i32_1 = arith.constant 0 : i32
    return %c0_i32, %c0_i32_0 : i32, i32
  }
  func.func @transform_2(%arg0: i32) -> (i32, i32) {
    %c0_i32 = arith.constant 0 : i32
    %c0_i32_0 = arith.constant 0 : i32
    %c0_i32_1 = arith.constant 0 : i32
    return %c0_i32, %c0_i32_0 : i32, i32
  }
  func.func @transform_3(%arg0: i32) -> (i32, i32) {
    %c0_i32 = arith.constant 0 : i32
    %c0_i32_0 = arith.constant 0 : i32
    return %arg0, %c0_i32 : i32, i32
  }
}

</mosaic_0001>

<llo_original>
// kernel: tpu_custom_call.1
$region0: #{tpu_custom_call.1}
  #allocation0 [shape = 'u32[]', space=smem, size = 0x4, offset = 0x4, fixed_abs, tag = 'smem constant byte address 0x4 - core index']
  #allocation1 [shape = 'u32[72,128]{1,0:T(1,128)}', space=vmem, size = 0x9000, scoped, tag = 'internal scratch']
  %s0 = inlined_call_operand.vmem [shape: f32[64,16], index: 0, kind: input, shape index: {}]
  %s1 = inlined_call_operand.vmem [shape: f32[16,256], index: 1, kind: input, shape index: {}]
  %s2 = inlined_call_operand.vmem [shape: f32[1,256], index: 2, kind: input, shape index: {}]
  %s3 = inlined_call_operand.hbm [shape: f32[64,256], index: 3, kind: output, shape index: {}]
  %s4 = sld [smem:[#allocation0]]
  $region22: #{tpu_custom_call.1} parent=0
    _
  %s6 = ssub.s32 1, %s4
  %s7 = scalar_select 0, %s6, %s4
  $region1: #{tpu_custom_call.1} parent=0
    #allocation2 [shape = 'u8[65536]{0}', space=vmem, size = 0x10000, scoped, tag = 'output window, operand 0, single buffered']
    #allocation3 [shape = 's32[1]{0}', space=sflag, size = 0x4, scoped, tag = 'scoped memory for tpu_custom_call.1']
    %8 = vsyncpa [#allocation3], 0
    // Predicated region
    $region2: #{tpu_custom_call.1} parent=1 // pred_check
      _
    $region3: #{tpu_custom_call.1} parent=1 // pred_check_branch
      %10 = sbr.rel (0) target = $region5
    $region4: #{tpu_custom_call.1} parent=1 // pred_region
      _
    $region5: #{tpu_custom_call.1} parent=1 // pred_fallthru
      _
    // Predicated region
    $region6: #{tpu_custom_call.1} parent=1 // pred_check
      _
    $region7: #{tpu_custom_call.1} parent=1 // pred_check_branch
      %12 = sbr.rel (0) target = $region9
    $region8: #{tpu_custom_call.1} parent=1 // pred_region
      _
    $region9: #{tpu_custom_call.1} parent=1 // pred_fallthru
      _
    // Predicated region
    $region10: #{tpu_custom_call.1} parent=1 // pred_check
      _
    $region11: #{tpu_custom_call.1} parent=1 // pred_check_branch
      %14 = sbr.rel (0) target = $region13
    $region12: #{tpu_custom_call.1} parent=1 // pred_region
      _
    $region13: #{tpu_custom_call.1} parent=1 // pred_fallthru
      _
    %v15 = vld [vmem:[%s0] sm:$0xff]
    %v16 = vld [vmem:[%s0 + $0x8] sm:$0xff]
    %v17 = vld [vmem:[%s0 + $0x10] sm:$0xff]
    %v18 = vld [vmem:[%s0 + $0x18] sm:$0xff]
    %v19 = vld [vmem:[%s0 + $0x20] sm:$0xff]
    %v20 = vld [vmem:[%s0 + $0x28] sm:$0xff]
    %v21 = vld [vmem:[%s0 + $0x30] sm:$0xff]
    %v22 = vld [vmem:[%s0 + $0x38] sm:$0xff]
    %v23 = vld [vmem:[%s1] sm:$0xff]
    %v24 = vld [vmem:[%s1 + $0x8] sm:$0xff]
    %v25 = vld [vmem:[%s1 + $0x10] sm:$0xff]
    %v26 = vld [vmem:[%s1 + $0x18] sm:$0xff]
    %v27 = vld [vmem:[%s2] sm:$0x3]
    %v29 = vperm.slane %v27, 0
    %v30 = vperm.slane %v27, 1
    %vm33 = vcmask 130048
    %v35 = vsel %vm33, %v15, 0
    %v38 = vsel %vm33, %v16, 0
    %v41 = vsel %vm33, %v17, 0
    %v44 = vsel %vm33, %v18, 0
    %v47 = vsel %vm33, %v19, 0
    %v50 = vsel %vm33, %v20, 0
    %v53 = vsel %vm33, %v21, 0
    %v56 = vsel %vm33, %v22, 0
    %58 = vmatpush.msra.mxu0 0.0
    %59 = vmatpush.msra.mxu0 0.0
    %60 = vmatpush.msra.mxu0 0.0
    %61 = vmatpush.msra.mxu0 0.0
    %62 = vmatpush.msra.mxu0 0.0
    %63 = vmatpush.msra.mxu0 0.0
    %64 = vmatpush.msra.mxu0 0.0
    %65 = vmatpush.msra.mxu0 0.0
    %66 = vmatpush.msra.mxu0 0.0
    %67 = vmatpush.msra.mxu0 0.0
    %68 = vmatpush.msra.mxu0 0.0
    %69 = vmatpush.msra.mxu0 0.0
    %70 = vmatpush.msra.mxu0 0.0
    %71 = vmatpush.msra.mxu0 0.0
    %72 = vmatpush.msra.mxu0 %v25
    %73 = vmatpush.msra.mxu0 %v23
    %74 = vmatmul.f32.gmra.mxu0 %v35
    %v75 = vpop.f32.mrf.mxu0
    %v76 = vadd.f32 %v29, %v75
    %77 = vmatmul.f32.gmra.mxu0 %v38
    %v78 = vpop.f32.mrf.mxu0
    %v79 = vadd.f32 %v29, %v78
    %80 = vmatmul.f32.gmra.mxu0 %v41
    %v81 = vpop.f32.mrf.mxu0
    %v82 = vadd.f32 %v29, %v81
    %83 = vmatmul.f32.gmra.mxu0 %v44
    %v84 = vpop.f32.mrf.mxu0
    %v85 = vadd.f32 %v29, %v84
    %86 = vmatmul.f32.gmra.mxu0 %v47
    %v87 = vpop.f32.mrf.mxu0
    %v88 = vadd.f32 %v29, %v87
    %89 = vmatmul.f32.gmra.mxu0 %v50
    %v90 = vpop.f32.mrf.mxu0
    %v91 = vadd.f32 %v29, %v90
    %92 = vmatmul.f32.gmra.mxu0 %v53
    %v93 = vpop.f32.mrf.mxu0
    %v94 = vadd.f32 %v29, %v93
    %95 = vmatmul.f32.gmra.mxu0 %v56
    %v96 = vpop.f32.mrf.mxu0
    %v97 = vadd.f32 %v29, %v96
    %98 = vdwg.mxu0
    %99 = vmatpush.msra.mxu0 0.0
    %100 = vmatpush.msra.mxu0 0.0
    %101 = vmatpush.msra.mxu0 0.0
    %102 = vmatpush.msra.mxu0 0.0
    %103 = vmatpush.msra.mxu0 0.0
    %104 = vmatpush.msra.mxu0 0.0
    %105 = vmatpush.msra.mxu0 0.0
    %106 = vmatpush.msra.mxu0 0.0
    %107 = vmatpush.msra.mxu0 0.0
    %108 = vmatpush.msra.mxu0 0.0
    %109 = vmatpush.msra.mxu0 0.0
    %110 = vmatpush.msra.mxu0 0.0
    %111 = vmatpush.msra.mxu0 0.0
    %112 = vmatpush.msra.mxu0 0.0
    %113 = vmatpush.msra.mxu0 %v26
    %114 = vmatpush.msra.mxu0 %v24
    %115 = vmatmul.f32.gmra.mxu0 %v35
    %v116 = vpop.f32.mrf.mxu0
    %v117 = vadd.f32 %v30, %v116
    %118 = vmatmul.f32.gmra.mxu0 %v38
    %v119 = vpop.f32.mrf.mxu0
    %v120 = vadd.f32 %v30, %v119
    %121 = vmatmul.f32.gmra.mxu0 %v41
    %v122 = vpop.f32.mrf.mxu0
    %v123 = vadd.f32 %v30, %v122
    %124 = vmatmul.f32.gmra.mxu0 %v44
    %v125 = vpop.f32.mrf.mxu0
    %v126 = vadd.f32 %v30, %v125
    %127 = vmatmul.f32.gmra.mxu0 %v47
    %v128 = vpop.f32.mrf.mxu0
    %v129 = vadd.f32 %v30, %v128
    %130 = vmatmul.f32.gmra.mxu0 %v50
    %v131 = vpop.f32.mrf.mxu0
    %v132 = vadd.f32 %v30, %v131
    %133 = vmatmul.f32.gmra.mxu0 %v53
    %v134 = vpop.f32.mrf.mxu0
    %v135 = vadd.f32 %v30, %v134
    %136 = vmatmul.f32.gmra.mxu0 %v56
    %v137 = vpop.f32.mrf.mxu0
    %v138 = vadd.f32 %v30, %v137
    %139 = vdwg.mxu0
    %140 = vst [vmem:[#allocation2] sm:$0xff] %v76
    %141 = vst [vmem:[#allocation2 + $0x8] sm:$0xff] %v117
    %142 = vst [vmem:[#allocation2 + $0x10] sm:$0xff] %v79
    %143 = vst [vmem:[#allocation2 + $0x18] sm:$0xff] %v120
    %144 = vst [vmem:[#allocation2 + $0x20] sm:$0xff] %v82
    %145 = vst [vmem:[#allocation2 + $0x28] sm:$0xff] %v123
    %146 = vst [vmem:[#allocation2 + $0x30] sm:$0xff] %v85
    %147 = vst [vmem:[#allocation2 + $0x38] sm:$0xff] %v126
    %148 = vst [vmem:[#allocation2 + $0x40] sm:$0xff] %v88
    %149 = vst [vmem:[#allocation2 + $0x48] sm:$0xff] %v129
    %150 = vst [vmem:[#allocation2 + $0x50] sm:$0xff] %v91
    %151 = vst [vmem:[#allocation2 + $0x58] sm:$0xff] %v132
    %152 = vst [vmem:[#allocation2 + $0x60] sm:$0xff] %v94
    %153 = vst [vmem:[#allocation2 + $0x68] sm:$0xff] %v135
    %154 = vst [vmem:[#allocation2 + $0x70] sm:$0xff] %v97
    %155 = vst [vmem:[#allocation2 + $0x78] sm:$0xff] %v138
    // Predicated region
    $region14: #{tpu_custom_call.1} parent=1 // pred_check
      _
    $region15: #{tpu_custom_call.1} parent=1 // pred_check_branch
      %157 = sbr.rel (0) target = $region17
    $region16: #{tpu_custom_call.1} parent=1 // pred_region
      %159 = vsyncadd [#allocation3], 0
      %s160 = sshll.u32 [#allocation2], 4
      %s161 = int_to_ptr.vmem [resolvable:$true] %s160
      %s162 = sshll.u32 %s3, 4
      %s163 = int_to_ptr.hbm [resolvable:$true] %s162
      %168 = dma.vmem_to_hbm [thread:$0]  %s161, 2048, %s163, [#allocation3], 256, 256, 16
    $region17: #{tpu_custom_call.1} parent=1 // pred_fallthru
      _
    // Predicated region
    $region18: #{tpu_custom_call.1} parent=1 // pred_check
      _
    $region19: #{tpu_custom_call.1} parent=1 // pred_check_branch
      %170 = sbr.rel (0) target = $region21
    $region20: #{tpu_custom_call.1} parent=1 // pred_region
      %172 = dma.done [#allocation3], 2048
    $region21: #{tpu_custom_call.1} parent=1 // pred_fallthru
      _
    %173 = vsyncpa [#allocation3], 1

</llo_original>
